<compile_context>
chip_gen: v5e
topology: v5e:2x2
jax: 0.10.0
libtpu: 0.0.40
codegen_flags: <defaults>
</compile_context>

<pallas_src>
import jax
import jax.numpy as jnp
import numpy as np
from jax.experimental import pallas as pl
from jax.experimental.pallas import tpu as pltpu


HIDDEN = 64
LANES = 128          # output row width; requires N + 2 <= LANES
NEG_INF = -1e30


def simplenet_kernel(a_ref, x_ref, w1b1_ref, wpack_ref, mask_ref, headb_ref,
                     out_ref):
    n = a_ref.shape[0]
    f_in = x_ref.shape[1]
    lanes = out_ref.shape[1]

    a = a_ref[...]                                   # [N, N] normalized adjacency
    x = x_ref[...]                                   # [N, F_in]
    w1 = w1b1_ref[:f_in, :]                          # [F_in, 64]
    b1 = w1b1_ref[f_in:, :]                          # [1, 64]

    # --- GCN layer 1: relu(A @ (X @ W1) + b1) ------------------------------
    h = jnp.dot(x, w1, preferred_element_type=jnp.float32)            # [N, 64]
    h = jnp.dot(a, h, preferred_element_type=jnp.float32) + b1
    h = jnp.maximum(h, 0.0)

    # --- packed heads: one MXU push for [w2 | wv | wn] ---------------------
    hp = jnp.dot(h, wpack_ref[...], preferred_element_type=jnp.float32)  # [N, 3]
    ap = jnp.dot(a, hp, preferred_element_type=jnp.float32)              # [N, 3]

    b2 = headb_ref[0]
    bv = headb_ref[1]
    bn = headb_ref[2]
    inv_n = jnp.float32(1.0 / n)
    # mean over nodes commutes with the linear heads: mean(h) @ wv == mean(h @ wv)
    v = jnp.sum(hp[:, 1:2], axis=0, keepdims=True) * inv_n + bv          # [1, 1]
    pn = jnp.sum(hp[:, 2:3], axis=0, keepdims=True) * inv_n + bn         # [1, 1]

    # --- move the prob-logit column into a lane-dense row ------------------
    # (multiply by a diagonal selector + sublane reduce: no transpose op)
    row_ids = jax.lax.broadcasted_iota(jnp.int32, (n, lanes), 0)
    col_ids = jax.lax.broadcasted_iota(jnp.int32, (n, lanes), 1)
    sel = (row_ids == col_ids).astype(jnp.float32)                       # [N, lanes]
    p_row = jnp.sum(ap[:, 0:1] * sel, axis=0, keepdims=True)             # [1, lanes]

    # --- masked softmax over [node logits (lanes 0..N-1) ; do-nothing (lane N)]
    lane = jax.lax.broadcasted_iota(jnp.int32, (1, lanes), 1)
    logits = jnp.where(lane == n, pn, p_row + b2) + mask_ref[...]        # [1, lanes]
    m = jnp.max(logits, axis=1, keepdims=True)
    e = jnp.exp(logits - m)
    s = jnp.sum(e, axis=1, keepdims=True)
    probs = e * pl.reciprocal(s, approx=True)

    # fold the value head into the same row (lane N+1) -> single output DMA
    out_ref[...] = jnp.where(lane == n + 1, v, probs)


def build_norm_adjacency(edge_index, num_nodes):
    """Dense GCN-normalized adjacency with self-loops for flow='target_to_source'.

    PyG gcn_norm: deg is computed on the aggregation index (the edge *source*
    for target_to_source) and edge weight = deg^-1/2[src] * deg^-1/2[dst];
    aggregation happens at the source node -> out = A_norm @ h.
    """
    src, dst = edge_index[0], edge_index[1]
    a = jnp.zeros((num_nodes, num_nodes), jnp.float32).at[src, dst].add(1.0)
    a = a + jnp.eye(num_nodes, dtype=jnp.float32)          # add self loops
    deg = jnp.sum(a, axis=1)                               # out-degree (source)
    dinv = jnp.where(deg > 0, 1.0 / jnp.sqrt(deg), 0.0)
    return dinv[:, None] * a * dinv[None, :]


def simplenet_pallas(x, edge_index, ready, params):
    n, f_in = x.shape
    assert n + 2 <= LANES, "kernel packs N+1 probs and v into one 128-lane row"
    a_norm = build_norm_adjacency(edge_index, n)

    # --- pack the small operands ------------------------------------------
    w1b1 = jnp.concatenate([params["w1"], params["b1"]], axis=0)        # [F_in+1, 64]
    wpack = jnp.concatenate([params["w2"], params["wv"], params["wn"]],
                            axis=1)                                     # [64, 3]
    head_b = jnp.concatenate([params["b2"].reshape(1),
                              params["bv"].reshape(1),
                              params["bn"].reshape(1)])                 # (3,) -> SMEM

    # additive mask row: 0 at ready-node lanes and the do-nothing lane (N),
    # -1e30 everywhere else (not-ready nodes + padding lanes).
    keep = jnp.zeros((LANES,), jnp.float32)
    keep = keep.at[:n].set(ready.reshape(-1).astype(jnp.float32)).at[n].set(1.0)
    mask_row = jnp.where(keep > 0.5, 0.0, NEG_INF).astype(jnp.float32)
    mask_row = mask_row.reshape(1, LANES)

    flops = int(2 * (n * f_in * HIDDEN + n * n * HIDDEN + n * HIDDEN * 3
                     + n * n * 3))
    bytes_accessed = int(4 * (a_norm.size + x.size + w1b1.size + wpack.size
                              + head_b.size + mask_row.size + LANES))

    vmem = pl.BlockSpec(memory_space=pltpu.MemorySpace.VMEM)
    smem = pl.BlockSpec(memory_space=pltpu.MemorySpace.SMEM)

    out_row = pl.pallas_call(
        simplenet_kernel,
        out_shape=jax.ShapeDtypeStruct((1, LANES), jnp.float32),
        in_specs=[vmem, vmem, vmem, vmem, vmem, smem],
        out_specs=vmem,
        cost_estimate=pl.CostEstimate(flops=flops,
                                      transcendentals=LANES,
                                      bytes_accessed=bytes_accessed),
    )(a_norm, x, w1b1, wpack, mask_row, head_b)
    # out_row[0, :n+1]  -> softmax probs ([ready-masked nodes ; do-nothing])
    # out_row[0, n+1]   -> value head
    return out_row


def reference_jax(x, edge_index, ready, params):
    """Pure-JAX reference mirroring the PyTorch forward."""
    n = x.shape[0]
    a = build_norm_adjacency(edge_index, n)
    h = jnp.maximum(a @ (x @ params["w1"]) + params["b1"], 0.0)
    p = a @ (h @ params["w2"]) + params["b2"]
    x_mean = jnp.mean(h, axis=0, keepdims=True)
    v = x_mean @ params["wv"] + params["bv"]
    pn = x_mean @ params["wn"] + params["bn"]
    logits = jnp.where(ready.reshape(n, 1) > 0.5, p, NEG_INF)
    logits = jnp.concatenate([logits, pn], axis=0)
    probs = jax.nn.softmax(logits, axis=0)
    return probs, v


def init_params(key, input_dim):
    ks = jax.random.split(key, 8)
    return {
        "w1": 0.1 * jax.random.normal(ks[0], (input_dim, HIDDEN), jnp.float32),
        "b1": 0.1 * jax.random.normal(ks[1], (1, HIDDEN), jnp.float32),
        "w2": 0.1 * jax.random.normal(ks[2], (HIDDEN, 1), jnp.float32),
        "b2": 0.1 * jax.random.normal(ks[3], (1, 1), jnp.float32),
        # Linear(64, 1): stored pre-transposed as [64, 1]
        "wv": 0.1 * jax.random.normal(ks[4], (HIDDEN, 1), jnp.float32),
        "bv": 0.1 * jax.random.normal(ks[5], (1, 1), jnp.float32),
        "wn": 0.1 * jax.random.normal(ks[6], (HIDDEN, 1), jnp.float32),
        "bn": 0.1 * jax.random.normal(ks[7], (1, 1), jnp.float32),
    }


if __name__ == "__main__":
    key = jax.random.PRNGKey(0)
    num_nodes = 8
    input_dim = 16

    k_x, k_p = jax.random.split(key)
    x = jax.random.normal(k_x, (num_nodes, input_dim), jnp.float32)
    edge_index = jnp.array(
        [[0, 1, 2, 3, 4, 5, 6, 7, 0, 2, 4, 6],
         [1, 2, 3, 4, 5, 6, 7, 0, 3, 5, 7, 1]], dtype=jnp.int32)
    ready = jnp.array([1, 0, 1, 1, 0, 1, 0, 1], dtype=jnp.int32)  # torch shape [N,1]
    params = init_params(k_p, input_dim)

    out_row = simplenet_pallas(x, edge_index, ready, params)
    out_row = jax.block_until_ready(out_row)

    probs_full = out_row[0, :num_nodes + 1]          # [N+1] softmax row
    v_val = out_row[0, num_nodes + 1]                # value head scalar

    # Reproduce PyTorch's data-dependent gather + concat (dynamic output
    # shape) outside the kernel: values at selected positions are identical
    # to softmax over the gathered logits.
    # TODO(synk): the boolean gather probs[ready] has a data-dependent output
    # shape and stays on the host.
    mask = np.asarray(ready, dtype=bool)
    probs = jnp.concatenate([probs_full[:num_nodes][mask],
                             probs_full[num_nodes:]])
    value = jnp.reshape(v_val, (1,))                 # like torch Linear(64, 1)

    # sanity check against a pure-JAX reference
    ref_probs_full, ref_v = reference_jax(x, edge_index, ready, params)
    np.testing.assert_allclose(np.asarray(probs_full),
                               np.asarray(ref_probs_full[:, 0]),
                               rtol=1e-2, atol=1e-2)
    np.testing.assert_allclose(np.asarray(v_val), np.asarray(ref_v[0, 0]),
                               rtol=1e-2, atol=1e-2)
    assert probs.shape == (int(mask.sum()) + 1,)
    assert value.shape == (1,)

    print("KERNEL_OK")
</pallas_src>

<mosaic_0001>
module attributes {stable_mosaic.version = 11 : i64} {
  func.func @simplenet_kernel(%arg0: memref<8x8xf32, #tpu.memory_space<vmem>>, %arg1: memref<8x16xf32, #tpu.memory_space<vmem>>, %arg2: memref<17x64xf32, #tpu.memory_space<vmem>>, %arg3: memref<64x3xf32, #tpu.memory_space<vmem>>, %arg4: memref<1x128xf32, #tpu.memory_space<vmem>>, %arg5: memref<3xf32, #tpu.memory_space<smem>>, %arg6: memref<1x128xf32, #tpu.memory_space<vmem>>) attributes {dimension_semantics = [], scalar_prefetch = 0 : i64, scratch_operands = 0 : i64, tpu.core_type = #tpu.core_type<tc>} {
    %c0 = arith.constant 0 : index
    %c0_0 = arith.constant 0 : index
    %0 = vector.load %arg0[%c0, %c0_0] : memref<8x8xf32, #tpu.memory_space<vmem>>, vector<8x8xf32>
    %c0_1 = arith.constant 0 : index
    %c0_2 = arith.constant 0 : index
    %1 = vector.load %arg1[%c0_1, %c0_2] : memref<8x16xf32, #tpu.memory_space<vmem>>, vector<8x16xf32>
    %c0_3 = arith.constant 0 : index
    %c0_4 = arith.constant 0 : index
    %2 = vector.load %arg2[%c0_3, %c0_4] : memref<17x64xf32, #tpu.memory_space<vmem>>, vector<16x64xf32>
    %c16 = arith.constant 16 : index
    %c0_5 = arith.constant 0 : index
    %3 = vector.load %arg2[%c16, %c0_5] : memref<17x64xf32, #tpu.memory_space<vmem>>, vector<1x64xf32>
    %cst = arith.constant dense<0.000000e+00> : vector<8x64xf32>
    %4 = tpu.matmul %1, %2, %cst {dimension_numbers = #tpu.dot_dimension_numbers<[1], [0], [0], [1], [0, 0, 1, 1], [], []>} : vector<8x16xf32>, vector<16x64xf32>, vector<8x64xf32> -> vector<8x64xf32>
    %cst_6 = arith.constant dense<0.000000e+00> : vector<8x64xf32>
    %5 = tpu.matmul %0, %4, %cst_6 {dimension_numbers = #tpu.dot_dimension_numbers<[1], [0], [0], [1], [0, 0, 1, 1], [], []>} : vector<8x8xf32>, vector<8x64xf32>, vector<8x64xf32> -> vector<8x64xf32>
    %6 = vector.broadcast %3 : vector<1x64xf32> to vector<8x64xf32>
    %7 = arith.addf %5, %6 : vector<8x64xf32>
    %cst_7 = arith.constant 0.000000e+00 : f32
    %8 = vector.broadcast %cst_7 : f32 to vector<8x64xf32>
    %9 = arith.maximumf %7, %8 : vector<8x64xf32>
    %c0_8 = arith.constant 0 : index
    %c0_9 = arith.constant 0 : index
    %10 = vector.load %arg3[%c0_8, %c0_9] : memref<64x3xf32, #tpu.memory_space<vmem>>, vector<64x3xf32>
    %cst_10 = arith.constant dense<0.000000e+00> : vector<8x3xf32>
    %11 = tpu.matmul %9, %10, %cst_10 {dimension_numbers = #tpu.dot_dimension_numbers<[1], [0], [0], [1], [0, 0, 1, 1], [], []>} : vector<8x64xf32>, vector<64x3xf32>, vector<8x3xf32> -> vector<8x3xf32>
    %cst_11 = arith.constant dense<0.000000e+00> : vector<8x3xf32>
    %12 = tpu.matmul %0, %11, %cst_11 {dimension_numbers = #tpu.dot_dimension_numbers<[1], [0], [0], [1], [0, 0, 1, 1], [], []>} : vector<8x8xf32>, vector<8x3xf32>, vector<8x3xf32> -> vector<8x3xf32>
    %c0_12 = arith.constant 0 : index
    %13 = memref.load %arg5[%c0_12] : memref<3xf32, #tpu.memory_space<smem>>
    %c1 = arith.constant 1 : index
    %14 = memref.load %arg5[%c1] : memref<3xf32, #tpu.memory_space<smem>>
    %c2 = arith.constant 2 : index
    %15 = memref.load %arg5[%c2] : memref<3xf32, #tpu.memory_space<smem>>
    %16 = vector.extract_strided_slice %11 {offsets = [0, 1], sizes = [8, 1], strides = [1, 1]} : vector<8x3xf32> to vector<8x1xf32>
    %cst_13 = arith.constant dense<0.000000e+00> : vector<1xf32>
    %17 = vector.multi_reduction <add>, %16, %cst_13 [0] : vector<8x1xf32> to vector<1xf32>
    %18 = vector.shape_cast %17 : vector<1xf32> to vector<1x1xf32>
    %cst_14 = arith.constant 1.250000e-01 : f32
    %19 = vector.broadcast %cst_14 : f32 to vector<1x1xf32>
    %20 = arith.mulf %18, %19 : vector<1x1xf32>
    %21 = vector.broadcast %14 : f32 to vector<1x1xf32>
    %22 = arith.addf %20, %21 : vector<1x1xf32>
    %23 = vector.extract_strided_slice %11 {offsets = [0, 2], sizes = [8, 1], strides = [1, 1]} : vector<8x3xf32> to vector<8x1xf32>
    %cst_15 = arith.constant dense<0.000000e+00> : vector<1xf32>
    %24 = vector.multi_reduction <add>, %23, %cst_15 [0] : vector<8x1xf32> to vector<1xf32>
    %25 = vector.shape_cast %24 : vector<1xf32> to vector<1x1xf32>
    %cst_16 = arith.constant 1.250000e-01 : f32
    %26 = vector.broadcast %cst_16 : f32 to vector<1x1xf32>
    %27 = arith.mulf %25, %26 : vector<1x1xf32>
    %28 = vector.broadcast %15 : f32 to vector<1x1xf32>
    %29 = arith.addf %27, %28 : vector<1x1xf32>
    %30 = tpu.iota {dimensions = array<i32: 0>} : vector<8x128xi32>
    %31 = tpu.iota {dimensions = array<i32: 1>} : vector<8x128xi32>
    %32 = arith.cmpi eq, %30, %31 : vector<8x128xi32>
    %33 = arith.extui %32 : vector<8x128xi1> to vector<8x128xi32>
    %34 = arith.sitofp %33 : vector<8x128xi32> to vector<8x128xf32>
    %35 = vector.extract_strided_slice %12 {offsets = [0, 0], sizes = [8, 1], strides = [1, 1]} : vector<8x3xf32> to vector<8x1xf32>
    %36 = vector.broadcast %35 : vector<8x1xf32> to vector<8x128xf32>
    %37 = arith.mulf %36, %34 : vector<8x128xf32>
    %cst_17 = arith.constant dense<0.000000e+00> : vector<128xf32>
    %38 = vector.multi_reduction <add>, %37, %cst_17 [0] : vector<8x128xf32> to vector<128xf32>
    %39 = vector.shape_cast %38 : vector<128xf32> to vector<1x128xf32>
    %40 = tpu.iota {dimensions = array<i32: 1>} : vector<1x128xi32>
    %c8_i32 = arith.constant 8 : i32
    %41 = vector.broadcast %c8_i32 : i32 to vector<1x128xi32>
    %42 = arith.cmpi eq, %40, %41 : vector<1x128xi32>
    %43 = vector.broadcast %13 : f32 to vector<1x128xf32>
    %44 = arith.addf %39, %43 : vector<1x128xf32>
    %45 = vector.shape_cast %29 : vector<1x1xf32> to vector<1x1xf32>
    %46 = vector.broadcast %45 : vector<1x1xf32> to vector<1x128xf32>
    %47 = arith.select %42, %46, %44 : vector<1x128xi1>, vector<1x128xf32>
    %c0_18 = arith.constant 0 : index
    %c0_19 = arith.constant 0 : index
    %48 = vector.load %arg4[%c0_18, %c0_19] : memref<1x128xf32, #tpu.memory_space<vmem>>, vector<1x128xf32>
    %49 = arith.addf %47, %48 : vector<1x128xf32>
    %cst_20 = arith.constant dense<0xFF800000> : vector<1xf32>
    %50 = vector.multi_reduction <maximumf>, %49, %cst_20 [1] : vector<1x128xf32> to vector<1xf32>
    %51 = vector.shape_cast %50 : vector<1xf32> to vector<1x1xf32>
    %52 = vector.broadcast %51 : vector<1x1xf32> to vector<1x128xf32>
    %53 = arith.subf %49, %52 : vector<1x128xf32>
    %54 = math.exp %53 : vector<1x128xf32>
    %cst_21 = arith.constant dense<0.000000e+00> : vector<1xf32>
    %55 = vector.multi_reduction <add>, %54, %cst_21 [1] : vector<1x128xf32> to vector<1xf32>
    %56 = vector.shape_cast %55 : vector<1xf32> to vector<1x1xf32>
    %57 = tpu.reciprocal %56 {approx = true} : vector<1x1xf32> -> vector<1x1xf32>
    %58 = vector.broadcast %57 : vector<1x1xf32> to vector<1x128xf32>
    %59 = arith.mulf %54, %58 : vector<1x128xf32>
    %c9_i32 = arith.constant 9 : i32
    %60 = vector.broadcast %c9_i32 : i32 to vector<1x128xi32>
    %61 = arith.cmpi eq, %40, %60 : vector<1x128xi32>
    %62 = vector.shape_cast %22 : vector<1x1xf32> to vector<1x1xf32>
    %63 = vector.broadcast %62 : vector<1x1xf32> to vector<1x128xf32>
    %64 = arith.select %61, %63, %59 : vector<1x128xi1>, vector<1x128xf32>
    %c0_22 = arith.constant 0 : index
    %c0_23 = arith.constant 0 : index
    %65 = vector.load %arg6[%c0_22, %c0_23] : memref<1x128xf32, #tpu.memory_space<vmem>>, vector<1x128xf32>
    tpu.vector_store %arg6[%c0_22, %c0_23], %64 {strides = array<i32>} : memref<1x128xf32, #tpu.memory_space<vmem>>, vector<1x128xf32>,
    return
  }
}

</mosaic_0001>

<llo_original>
// kernel: tpu_custom_call.1
$region0: #{tpu_custom_call.1}
  #allocation0 [shape = 'u32[]', space=smem, size = 0x4, offset = 0x4, fixed_abs, tag = 'smem constant byte address 0x4 - core index']
  #allocation1 [shape = 'u32[72,128]{1,0:T(1,128)}', space=vmem, size = 0x9000, scoped, tag = 'internal scratch']
  %s0 = inlined_call_operand.vmem [shape: f32[8,8], index: 0, kind: input, shape index: {}]
  %s1 = inlined_call_operand.vmem [shape: f32[8,16], index: 1, kind: input, shape index: {}]
  %s2 = inlined_call_operand.vmem [shape: f32[17,64], index: 2, kind: input, shape index: {}]
  %s3 = inlined_call_operand.vmem [shape: f32[64,3], index: 3, kind: input, shape index: {}]
  %s4 = inlined_call_operand.vmem [shape: f32[1,128], index: 4, kind: input, shape index: {}]
  %s5 = inlined_call_operand.vmem [shape: f32[3], index: 5, kind: input, shape index: {}]
  %s6 = inlined_call_operand.hbm [shape: f32[1,128], index: 6, kind: output, shape index: {}]
  %s7 = sld [smem:[#allocation0]]
  $region38: #{tpu_custom_call.1} parent=0
    _
  %s9 = ssub.s32 1, %s7
  %s10 = scalar_select 0, %s9, %s7
  $region1: #{tpu_custom_call.1} parent=0
    #allocation2 [shape = 'u8[512]{0}', space=smem, size = 0x200, scoped, tag = 'input window, operand 5, single buffered']
    #allocation3 [shape = 's32[1]{0}', space=sflag, size = 0x4, scoped, tag = 'scoped memory for tpu_custom_call.1']
    #allocation4 [shape = 's32[1]{0}', space=sflag, size = 0x4, scoped, tag = 'scoped memory for tpu_custom_call.1']
    #allocation5 [shape = 'u8[512]{0}', space=vmem, size = 0x400, scoped, tag = 'output window, operand 0, single buffered']
    %11 = vsyncpa [#allocation4], 0
    %12 = vsyncpa [#allocation3], 0
    // Predicated region
    $region2: #{tpu_custom_call.1} parent=1 // pred_check
      _
    $region3: #{tpu_custom_call.1} parent=1 // pred_check_branch
      %14 = sbr.rel (0) target = $region5
    $region4: #{tpu_custom_call.1} parent=1 // pred_region
      _
    $region5: #{tpu_custom_call.1} parent=1 // pred_fallthru
      _
    // Predicated region
    $region6: #{tpu_custom_call.1} parent=1 // pred_check
      _
    $region7: #{tpu_custom_call.1} parent=1 // pred_check_branch
      %16 = sbr.rel (0) target = $region9
    $region8: #{tpu_custom_call.1} parent=1 // pred_region
      _
    $region9: #{tpu_custom_call.1} parent=1 // pred_fallthru
      _
    // Predicated region
    $region10: #{tpu_custom_call.1} parent=1 // pred_check
      _
    $region11: #{tpu_custom_call.1} parent=1 // pred_check_branch
      %18 = sbr.rel (0) target = $region13
    $region12: #{tpu_custom_call.1} parent=1 // pred_region
      _
    $region13: #{tpu_custom_call.1} parent=1 // pred_fallthru
      _
    // Predicated region
    $region14: #{tpu_custom_call.1} parent=1 // pred_check
      _
    $region15: #{tpu_custom_call.1} parent=1 // pred_check_branch
      %20 = sbr.rel (0) target = $region17
    $region16: #{tpu_custom_call.1} parent=1 // pred_region
      _
    $region17: #{tpu_custom_call.1} parent=1 // pred_fallthru
      _
    // Predicated region
    $region18: #{tpu_custom_call.1} parent=1 // pred_check
      _
    $region19: #{tpu_custom_call.1} parent=1 // pred_check_branch
      %22 = sbr.rel (0) target = $region21
    $region20: #{tpu_custom_call.1} parent=1 // pred_region
      _
    $region21: #{tpu_custom_call.1} parent=1 // pred_fallthru
      _
    // Predicated region
    $region22: #{tpu_custom_call.1} parent=1 // pred_check
      _
    $region23: #{tpu_custom_call.1} parent=1 // pred_check_branch
      %24 = sbr.rel (0) target = $region25
    $region24: #{tpu_custom_call.1} parent=1 // pred_region
      %26 = vsyncadd [#allocation4], 0
      %s28 = sshll.u32 %s5, 4
      %s29 = int_to_ptr.vmem [resolvable:$true] %s28
      %31 = dma.vmem_to_smem %s29, 16, [#allocation2], [#allocation4]
    $region25: #{tpu_custom_call.1} parent=1 // pred_fallthru
      _
    // Predicated region
    $region26: #{tpu_custom_call.1} parent=1 // pred_check
      _
    $region27: #{tpu_custom_call.1} parent=1 // pred_check_branch
      %33 = sbr.rel (0) target = $region29
    $region28: #{tpu_custom_call.1} parent=1 // pred_region
      %35 = dma.done [#allocation4], 16
    $region29: #{tpu_custom_call.1} parent=1 // pred_fallthru
      _
    %36 = sfence
    %v37 = vld [vmem:[%s0] sm:$0xff]
    %v38 = vld [vmem:[%s1] sm:$0xff]
    %v39 = vld [vmem:[%s2] sm:$0xff]
    %v40 = vld [vmem:[%s2 + $0x8] sm:$0xff]
    %v41 = vld [vmem:[%s2 + $0x10] sm:$0x1]
    %vm42 = vcmask 130048
    %v44 = vsel %vm42, %v38, 0
    %46 = vmatpush.msra.mxu0 0.0
    %47 = vmatpush.msra.mxu0 0.0
    %48 = vmatpush.msra.mxu0 0.0
    %49 = vmatpush.msra.mxu0 0.0
    %50 = vmatpush.msra.mxu0 0.0
    %51 = vmatpush.msra.mxu0 0.0
    %52 = vmatpush.msra.mxu0 0.0
    %53 = vmatpush.msra.mxu0 0.0
    %54 = vmatpush.msra.mxu0 0.0
    %55 = vmatpush.msra.mxu0 0.0
    %56 = vmatpush.msra.mxu0 0.0
    %57 = vmatpush.msra.mxu0 0.0
    %58 = vmatpush.msra.mxu0 0.0
    %59 = vmatpush.msra.mxu0 0.0
    %60 = vmatpush.msra.mxu0 %v40
    %61 = vmatpush.msra.mxu0 %v39
    %62 = vmatmul.f32.gmra.mxu0 %v44
    %v63 = vpop.f32.mrf.mxu0
    %v64 = vadd.f32 0.0, %v63
    %65 = vdwg.mxu0
    %v66 = vperm.slane %v41, 0
    %vm67 = vcmask 64512
    %v69 = vsel %vm67, %v37, 0
    %71 = vmatpush.msra.mxu0 0.0
    %72 = vmatpush.msra.mxu0 0.0
    %73 = vmatpush.msra.mxu0 0.0
    %74 = vmatpush.msra.mxu0 0.0
    %75 = vmatpush.msra.mxu0 0.0
    %76 = vmatpush.msra.mxu0 0.0
    %77 = vmatpush.msra.mxu0 0.0
    %78 = vmatpush.msra.mxu0 0.0
    %79 = vmatpush.msra.mxu0 0.0
    %80 = vmatpush.msra.mxu0 0.0
    %81 = vmatpush.msra.mxu0 0.0
    %82 = vmatpush.msra.mxu0 0.0
    %83 = vmatpush.msra.mxu0 0.0
    %84 = vmatpush.msra.mxu0 0.0
    %85 = vmatpush.msra.mxu0 0.0
    %86 = vmatpush.msra.mxu0 %v64
    %87 = vmatmul.f32.gmra.mxu0 %v69
    %v88 = vpop.f32.mrf.mxu0
    %v89 = vadd.f32 %v66, %v88
    %90 = vdwg.mxu0
    %v91 = vmax.f32 %v89, 0.0
    %v92 = vld [vmem:[%s3] sm:$0xff]
    %v93 = vld [vmem:[%s3 + $0x8] sm:$0xff]
    %v94 = vld [vmem:[%s3 + $0x10] sm:$0xff]
    %v95 = vld [vmem:[%s3 + $0x18] sm:$0xff]
    %v96 = vld [vmem:[%s3 + $0x20] sm:$0xff]
    %v97 = vld [vmem:[%s3 + $0x28] sm:$0xff]
    %v98 = vld [vmem:[%s3 + $0x30] sm:$0xff]
    %v99 = vld [vmem:[%s3 + $0x38] sm:$0xff]
    %vm100 = vcmask 523264
    %v102 = vsel %vm100, %v91, 0
    %104 = vmatpush.msra.mxu0 0.0
    %105 = vmatpush.msra.mxu0 0.0
    %106 = vmatpush.msra.mxu0 0.0
    %107 = vmatpush.msra.mxu0 0.0
    %108 = vmatpush.msra.mxu0 0.0
    %109 = vmatpush.msra.mxu0 0.0
    %110 = vmatpush.msra.mxu0 0.0
    %111 = vmatpush.msra.mxu0 0.0
    %112 = vmatpush.msra.mxu0 %v99
    %113 = vmatpush.msra.mxu0 %v98
    %114 = vmatpush.msra.mxu0 %v97
    %115 = vmatpush.msra.mxu0 %v96
    %116 = vmatpush.msra.mxu0 %v95
    %117 = vmatpush.msra.mxu0 %v94
    %118 = vmatpush.msra.mxu0 %v93
    %119 = vmatpush.msra.mxu0 %v92
    %120 = vmatmul.f32.gmra.mxu0 %v102
    %v121 = vpop.f32.mrf.mxu0
    %v122 = vadd.f32 0.0, %v121
    %123 = vdwg.mxu0
    %124 = vmatpush.msra.mxu0 0.0
    %125 = vmatpush.msra.mxu0 0.0
    %126 = vmatpush.msra.mxu0 0.0
    %127 = vmatpush.msra.mxu0 0.0
    %128 = vmatpush.msra.mxu0 0.0
    %129 = vmatpush.msra.mxu0 0.0
    %130 = vmatpush.msra.mxu0 0.0
    %131 = vmatpush.msra.mxu0 0.0
    %132 = vmatpush.msra.mxu0 0.0
    %133 = vmatpush.msra.mxu0 0.0
    %134 = vmatpush.msra.mxu0 0.0
    %135 = vmatpush.msra.mxu0 0.0
    %136 = vmatpush.msra.mxu0 0.0
    %137 = vmatpush.msra.mxu0 0.0
    %138 = vmatpush.msra.mxu0 0.0
    %139 = vmatpush.msra.mxu0 %v122
    %140 = vmatmul.f32.gmra.mxu0 %v69
    %v141 = vpop.f32.mrf.mxu0
    %v142 = vadd.f32 0.0, %v141
    %143 = vdwg.mxu0
    %s144 = sld [smem:[#allocation2]]
    %s145 = sld [smem:[#allocation2 + $0x1]]
    %s146 = sld [smem:[#allocation2 + $0x2]]
    %vm147 = vcmask 15368
    %v148 = vsel %vm147, %v122, 0.0
    %v149 = vrot.slane %v148, 4
    %v150 = vadd.f32 %v148, %v149
    %v151 = vrot.slane %v150, 2
    %v152 = vadd.f32 %v150, %v151
    %v153 = vrot.slane %v152, 1
    %v154 = vadd.f32 %v152, %v153
    %v155 = vmul.f32 %v154, 0.125
    %v156 = vstv %s145
    %v157 = vadd.f32 %v155, %v156
    %vm158 = vcmask 23568
    %v159 = vsel %vm158, %v122, 0.0
    %v160 = vrot.slane %v159, 4
    %v161 = vadd.f32 %v159, %v160
    %v162 = vrot.slane %v161, 2
    %v163 = vadd.f32 %v161, %v162
    %v164 = vrot.slane %v163, 1
    %v165 = vadd.f32 %v163, %v164
    %v166 = vmul.f32 %v165, 0.125
    %v167 = vstv %s146
    %v168 = vadd.f32 %v166, %v167
    %v169 = vlaneseq
    %v170 = vshrl.u32 %v169, 7
    %v171 = vlaneseq
    %v172 = vand.u32 %v171, 127
    %vm173 = vcmp.eq.s32.totalorder %v170, %v172
    %v174 = vsel %vm173, 1, 0
    %v175 = vcvt.s32.f32 %v174
    %177 = vset.pattern.permute.xlu0 0
    %178 = vperm.xlu0 %177, %v142
    %v179 = vpop.permute.xlu0 %178
    %v181 = vmul.f32 %v179, %v175
    %v182 = vrot.slane %v181, 4
    %v183 = vadd.f32 %v181, %v182
    %v184 = vrot.slane %v183, 2
    %v185 = vadd.f32 %v183, %v184
    %v186 = vrot.slane %v185, 1
    %v187 = vadd.f32 %v185, %v186
    %vm188 = vcmp.eq.s32.totalorder %v172, 8
    %v189 = vstv %s144
    %v190 = vadd.f32 %v187, %v189
    %192 = vset.pattern.permute.xlu0 2
    %193 = vperm.xlu0 %192, %v168
    %v194 = vpop.permute.xlu0 %193
    %v196 = vsel %vm188, %v194, %v190
    %v197 = vld [vmem:[%s4] sm:$0x1]
    %v198 = vadd.f32 %v196, %v197
    %vm199 = vcmask 1040384
    %v200 = vsel %vm199, %v198, -inf
    %201 = vmax.xlane.f32.xlu0 %v200
    %v202 = vpop.xlane.xlu0 %201
    %v203 = vsub.f32 %v198, %v202
    %v204 = vmul.f32 %v203, 1.442695
    %v205 = vpow.pop %v204
    %v206 = vsel %vm199, %v205, 0.0
    %207 = vadd.xlane.f32.xlu0 %v206
    %v208 = vpop.xlane.xlu0 %207
    %v209 = vrcp.pop %v208
    %v210 = vmul.f32 %v205, %v209
    %vm211 = vcmp.eq.s32.totalorder %v172, 9
    %213 = vset.pattern.permute.xlu0 1
    %214 = vperm.xlu0 %213, %v157
    %v215 = vpop.permute.xlu0 %214
    %v217 = vsel %vm211, %v215, %v210
    %218 = vst [vmem:[#allocation5] sm:$0x1] %v217
    // Predicated region
    $region30: #{tpu_custom_call.1} parent=1 // pred_check
      _
    $region31: #{tpu_custom_call.1} parent=1 // pred_check_branch
      %220 = sbr.rel (0) target = $region33
    $region32: #{tpu_custom_call.1} parent=1 // pred_region
      %222 = vsyncadd [#allocation3], 0
      %s224 = sshll.u32 [#allocation5], 4
      %s225 = int_to_ptr.vmem [resolvable:$true] %s224
      %s226 = sshll.u32 %s6, 4
      %s227 = int_to_ptr.hbm [resolvable:$true] %s226
      %229 = dma.vmem_to_hbm [thread:$0]  %s225, 16, %s227, [#allocation3]
    $region33: #{tpu_custom_call.1} parent=1 // pred_fallthru
      _
    // Predicated region
    $region34: #{tpu_custom_call.1} parent=1 // pred_check
      _
    $region35: #{tpu_custom_call.1} parent=1 // pred_check_branch
      %231 = sbr.rel (0) target = $region37
    $region36: #{tpu_custom_call.1} parent=1 // pred_region
      %233 = dma.done [#allocation3], 16
    $region37: #{tpu_custom_call.1} parent=1 // pred_fallthru
      _
    %234 = vsyncpa [#allocation3], 1
    %235 = vsyncpa [#allocation4], 1

</llo_original>
